<compile_context>
chip_gen: v7x
topology: tpu7x:2x2x1
jax: 0.10.0
libtpu: 0.0.40
codegen_flags: <defaults>
</compile_context>

<pallas_src>
import math
import functools

import jax
import jax.numpy as jnp
from jax.experimental import pallas as pl
from jax.experimental.pallas import tpu as pltpu

_LANE = 128
_SUBLANE = 8
_BLOCK_BYTES = 2 * 1024 * 1024  # ~2 MiB per streamed f32 block (fits every TPU gen)


# ---------------------------------------------------------------------------
# Kernels (lane-dense 2-D tiles: x (tr, tc), pe (pe_rows, tc) with pe_rows in {1, tr})
# ---------------------------------------------------------------------------
def _pe_add_eval_kernel(x_ref, pe_ref, o_ref):
    y = x_ref[...].astype(jnp.float32) + pe_ref[...].astype(jnp.float32)
    o_ref[...] = y.astype(o_ref.dtype)


def _pe_add_dropout_kernel(p, x_ref, pe_ref, u_ref, o_ref):
    # Inverted dropout: keep w.p. 1-p, scale kept values by 1/(1-p).
    y = x_ref[...].astype(jnp.float32) + pe_ref[...].astype(jnp.float32)
    keep = u_ref[...] >= jnp.float32(p)
    y = jnp.where(keep, y * jnp.float32(1.0 / (1.0 - p)), jnp.float32(0.0))
    o_ref[...] = y.astype(o_ref.dtype)


# ---------------------------------------------------------------------------
# Helpers
# ---------------------------------------------------------------------------
def make_positional_encoding_params(d_model, max_len=5000, dtype=jnp.float32):
    """Deterministic construction of the `pe` buffer, same formula as PyTorch."""
    position = jnp.arange(0, max_len, dtype=jnp.float32)[:, None]          # (L, 1)
    div_term = jnp.exp(jnp.arange(0, d_model, 2, dtype=jnp.float32)
                       * (-math.log(10000.0) / d_model))                   # (D/2,)
    angles = position * div_term                                            # (L, D/2)
    pe = jnp.zeros((max_len, d_model), dtype=jnp.float32)
    pe = pe.at[:, 0::2].set(jnp.sin(angles))
    pe = pe.at[:, 1::2].set(jnp.cos(angles))
    return pe.astype(dtype)


def _choose_layout(B, S, D):
    """Pick (Sr, Sc) with S == Sr*Sc: x viewed as (B*Sr, Sc*D), pe as (Sr, Sc*D).

    Sr == 1 is the plain (B, S*D) broadcast layout.  For small batch we try to
    fold part of the sequence into rows so tiles are sublane-dense
    (Sr % 8 == 0) while keeping the lane dim a multiple of 128.
    """
    if B >= _SUBLANE:
        return 1, S
    for Sc in range(1, S + 1):
        if S % Sc:
            continue
        Sr = S // Sc
        if Sr == 1:
            break
        if ((Sc * D) % _LANE == 0 and Sr % _SUBLANE == 0
                and Sr * _LANE * 4 <= _BLOCK_BYTES):
            return Sr, Sc
    return 1, S


def _row_tile(R, Sr):
    if Sr > 1:
        # Folded layout: one row block per batch element -> pe's block index is
        # constant over the inner grid axis (pe stays resident in VMEM).
        return Sr
    # Broadcast layout: full B when it fits, else a sublane-aligned 256-row tile
    # (ragged last block handled by the cdiv grid).
    return R if R <= 256 else 256


def _col_tile(C, tr):
    # Largest multiple-of-128 column tile keeping one f32 block <= ~2 MiB.
    budget = max(_LANE, (_BLOCK_BYTES // (tr * 4)) // _LANE * _LANE)
    return C if C <= budget else budget


# ---------------------------------------------------------------------------
# Wrapper
# ---------------------------------------------------------------------------
def positional_encoding(x, pe, *, dropout_p=0.1, training=False, seed=0):
    """x: (B, S, D), pe: (max_len, D). Returns (B, S, D).

    Same forward semantics as the PyTorch module (dropout mask differs from
    torch's exact RNG stream).
    """
    B, S, D = x.shape

    if training and dropout_p >= 1.0:
        # nn.Dropout(p=1) zeroes everything.
        return jnp.zeros_like(x)

    Sr, Sc = _choose_layout(B, S, D)
    R, C = B * Sr, Sc * D
    x2 = x.reshape(R, C)
    pe2 = pe[:S].astype(jnp.float32).reshape(Sr, C)

    tr = _row_tile(R, Sr)
    tc = _col_tile(C, tr)
    grid = (pl.cdiv(C, tc), pl.cdiv(R, tr))          # cols outer, rows inner

    x_spec = pl.BlockSpec((tr, tc), lambda c, r: (r, c))
    pe_spec = pl.BlockSpec((Sr, tc), lambda c, r: (0, c))   # constant over inner axis
    out_spec = pl.BlockSpec((tr, tc), lambda c, r: (r, c))
    out_shape = jax.ShapeDtypeStruct((R, C), x.dtype)
    params = pltpu.CompilerParams(
        dimension_semantics=("parallel", "parallel"),
        vmem_limit_bytes=32 * 1024 * 1024,
    )
    # Note: input_output_aliases={0: 0} could reuse x's HBM buffer for the
    # output on hardware; omitted here to keep interpreter runs simple.

    if not training or dropout_p <= 0.0:
        out2 = pl.pallas_call(
            _pe_add_eval_kernel,
            out_shape=out_shape,
            grid=grid,
            in_specs=[x_spec, pe_spec],
            out_specs=out_spec,
            compiler_params=params,
        )(x2, pe2)
        return out2.reshape(B, S, D)

    # Training mode: inverted dropout fused into the kernel.  Randomness is a
    # host-generated uniform stream so the kernel lowers on the interpreter
    # and on hardware, and the mask is tiling-independent.
    # TODO(synk): on a real TPU an in-kernel pltpu.prng_random_bits draw would
    # avoid this extra (R, C) f32 HBM read; torch's exact RNG stream is not
    # reproducible either way.
    u = jax.random.uniform(jax.random.PRNGKey(seed), (R, C), dtype=jnp.float32)
    kernel = functools.partial(_pe_add_dropout_kernel, float(dropout_p))
    out2 = pl.pallas_call(
        kernel,
        out_shape=out_shape,
        grid=grid,
        in_specs=[x_spec, pe_spec, x_spec],   # u shares x's tiling
        out_specs=out_spec,
        compiler_params=params,
    )(x2, pe2, u)
    return out2.reshape(B, S, D)


# ---------------------------------------------------------------------------
# Main
# ---------------------------------------------------------------------------
if __name__ == "__main__":
    B, S, D = 2, 8, 32
    MAX_LEN = 64  # module default is 5000; only pe[:S] is used

    key = jax.random.PRNGKey(0)
    x = jax.random.normal(key, (B, S, D), dtype=jnp.float32)
    pe = make_positional_encoding_params(D, max_len=MAX_LEN)

    ref = x + pe[:S][None, :, :]

    # Eval-mode forward (deterministic, matches PyTorch module.eval()).
    out = positional_encoding(x, pe, dropout_p=0.1, training=False)
    out = jax.block_until_ready(out)
    assert out.shape == (B, S, D)
    assert jnp.allclose(out, ref, atol=1e-6, rtol=1e-6), "eval mismatch vs reference"

    # Training-mode forward (inverted dropout): kept elements equal ref/(1-p).
    p = 0.1
    out_tr = positional_encoding(x, pe, dropout_p=p, training=True, seed=42)
    out_tr = jax.block_until_ready(out_tr)
    assert out_tr.shape == (B, S, D)
    kept = out_tr != 0.0
    assert jnp.allclose(out_tr[kept], (ref / (1.0 - p))[kept], atol=1e-5, rtol=1e-5), \
        "train mismatch vs scaled reference on kept elements"

    print("KERNEL_OK")
</pallas_src>

<mosaic_0001>
module attributes {stable_mosaic.version = 11 : i64} {
  func.func @_pe_add_eval_kernel(%arg0: i32, %arg1: i32, %arg2: memref<2x256xf32, #tpu.memory_space<vmem>>, %arg3: memref<1x256xf32, #tpu.memory_space<vmem>>, %arg4: memref<2x256xf32, #tpu.memory_space<vmem>>) attributes {dimension_semantics = [#tpu.dimension_semantics<parallel>, #tpu.dimension_semantics<parallel>], iteration_bounds = array<i64: 1, 1>, scalar_prefetch = 0 : i64, scratch_operands = 0 : i64, tpu.core_type = #tpu.core_type<tc>, window_params = [{transform_indices = @transform_0, window_bounds = array<i64: 2, 256>}, {transform_indices = @transform_1, window_bounds = array<i64: 1, 256>}, {transform_indices = @transform_2, window_bounds = array<i64: 2, 256>}]} {
    %c0 = arith.constant 0 : index
    %c0_0 = arith.constant 0 : index
    %0 = vector.load %arg2[%c0, %c0_0] : memref<2x256xf32, #tpu.memory_space<vmem>>, vector<2x256xf32>
    %c0_1 = arith.constant 0 : index
    %c0_2 = arith.constant 0 : index
    %1 = vector.load %arg3[%c0_1, %c0_2] : memref<1x256xf32, #tpu.memory_space<vmem>>, vector<1x256xf32>
    %2 = vector.broadcast %1 : vector<1x256xf32> to vector<2x256xf32>
    %3 = arith.addf %0, %2 : vector<2x256xf32>
    %c0_3 = arith.constant 0 : index
    %c0_4 = arith.constant 0 : index
    %4 = vector.load %arg4[%c0_3, %c0_4] : memref<2x256xf32, #tpu.memory_space<vmem>>, vector<2x256xf32>
    tpu.vector_store %arg4[%c0_3, %c0_4], %3 {strides = array<i32>} : memref<2x256xf32, #tpu.memory_space<vmem>>, vector<2x256xf32>,
    return
  }
  func.func @transform_0(%arg0: i32, %arg1: i32) -> (i32, i32) {
    %c0_i32 = arith.constant 0 : i32
    return %arg1, %arg0 : i32, i32
  }
  func.func @transform_1(%arg0: i32, %arg1: i32) -> (i32, i32) {
    %c0_i32 = arith.constant 0 : i32
    %c0_i32_0 = arith.constant 0 : i32
    return %c0_i32, %arg0 : i32, i32
  }
  func.func @transform_2(%arg0: i32, %arg1: i32) -> (i32, i32) {
    %c0_i32 = arith.constant 0 : i32
    return %arg1, %arg0 : i32, i32
  }
}

</mosaic_0001>

<llo_original>
// kernel: tpu_custom_call.1
$region0: #{tpu_custom_call.1}
  #allocation0 [shape = 'u32[]', space=smem, size = 0x4, offset = 0x4, fixed_abs, tag = 'smem constant byte address 0x4 - core index']
  #allocation1 [shape = 'u32[144,128]{1,0:T(1,128)}', space=vmem, size = 0x12000, scoped, tag = 'internal scratch']
  %s0 = inlined_call_operand.hbm [shape: f32[2,256], index: 0, kind: input, shape index: {}]
  %s1 = inlined_call_operand.vmem [shape: f32[1,256], index: 1, kind: input, shape index: {}]
  %s2 = inlined_call_operand.hbm [shape: f32[2,256], index: 2, kind: output, shape index: {}]
  %s3 = sld [smem:[#allocation0]]
  $region22: #{tpu_custom_call.1} parent=0
    _
  %s5 = ssub.s32 1, %s3
  %s6 = scalar_select 0, %s5, %s3
  $region1: #{tpu_custom_call.1} parent=0
    #allocation2 [shape = 'u8[2048]{0}', space=vmem, size = 0x800, scoped, tag = 'input window, operand 0, single buffered']
    #allocation3 [shape = 's32[1]{0}', space=sflag, size = 0x4, scoped, tag = 'scoped memory for tpu_custom_call.1']
    #allocation4 [shape = 's32[1]{0}', space=sflag, size = 0x4, scoped, tag = 'scoped memory for tpu_custom_call.1']
    #allocation5 [shape = 'u8[2048]{0}', space=vmem, size = 0x800, scoped, tag = 'output window, operand 0, single buffered']
    %7 = vsyncpa [#allocation3], 0
    %8 = vsyncpa [#allocation4], 0
    // Predicated region
    $region2: #{tpu_custom_call.1} parent=1 // pred_check
      _
    $region3: #{tpu_custom_call.1} parent=1 // pred_check_branch
      %10 = sbr.rel (0) target = $region5
    $region4: #{tpu_custom_call.1} parent=1 // pred_region
      %s12 = ssub.s32 64, 64
      %13 = vsyncadd [#allocation3], %s12
      %s15 = sshll.u32 [#allocation2], 4
      %s16 = int_to_ptr.vmem [resolvable:$true] %s15
      %18 = dma.hbm_to_vmem [thread:$0]  %s0, 64, %s16, [#allocation3]
    $region5: #{tpu_custom_call.1} parent=1 // pred_fallthru
      _
    // Predicated region
    $region6: #{tpu_custom_call.1} parent=1 // pred_check
      _
    $region7: #{tpu_custom_call.1} parent=1 // pred_check_branch
      %20 = sbr.rel (0) target = $region9
    $region8: #{tpu_custom_call.1} parent=1 // pred_region
      _
    $region9: #{tpu_custom_call.1} parent=1 // pred_fallthru
      _
    // Predicated region
    $region10: #{tpu_custom_call.1} parent=1 // pred_check
      _
    $region11: #{tpu_custom_call.1} parent=1 // pred_check_branch
      %22 = sbr.rel (0) target = $region13
    $region12: #{tpu_custom_call.1} parent=1 // pred_region
      %23 = dma.done [#allocation3], 64
    $region13: #{tpu_custom_call.1} parent=1 // pred_fallthru
      _
    %v24 = vld [vmem:[#allocation2] sm:$0xf]
    %v25 = vld [vmem:[%s1] sm:$0x3]
    %v27 = vlaneseq
    %v28 = vshrl.u32 %v27, 7
    %v29 = vsub.s32 0, %v28
    %v30 = vrot.slane %v25, %v29
    %v31 = vlaneseq
    %v32 = vshrl.u32 %v31, 7
    %v33 = vsub.s32 1, %v32
    %v34 = vrot.slane %v25, %v33
    %v35 = vcombine.low %v30, %v34
    %v37 = vunpack.c.l.s4 1983009808
    %v38 = vunpack.c.0.s8 %v37
    %v39 = vlaneseq
    %v40 = vshrl.u32 %v39, 7
    %v41 = vsub.s32 %v38, %v40
    %v42 = vrot.slane %v35, %v41
    %v44 = vadd.f32 %v24, %v42
    %45 = vst [vmem:[#allocation5] sm:$0xf] %v44
    // Predicated region
    $region14: #{tpu_custom_call.1} parent=1 // pred_check
      _
    $region15: #{tpu_custom_call.1} parent=1 // pred_check_branch
      %47 = sbr.rel (0) target = $region17
    $region16: #{tpu_custom_call.1} parent=1 // pred_region
      %s49 = ssub.s32 64, 64
      %50 = vsyncadd [#allocation4], %s49
      %s52 = sshll.u32 [#allocation5], 4
      %s53 = int_to_ptr.vmem [resolvable:$true] %s52
      %55 = dma.vmem_to_hbm [thread:$0]  %s53, 64, %s2, [#allocation4]
    $region17: #{tpu_custom_call.1} parent=1 // pred_fallthru
      _
    // Predicated region
    $region18: #{tpu_custom_call.1} parent=1 // pred_check
      _
    $region19: #{tpu_custom_call.1} parent=1 // pred_check_branch
      %57 = sbr.rel (0) target = $region21
    $region20: #{tpu_custom_call.1} parent=1 // pred_region
      %58 = dma.done [#allocation4], 64
    $region21: #{tpu_custom_call.1} parent=1 // pred_fallthru
      _
    %59 = vsyncpa [#allocation3], 1
    %60 = vsyncpa [#allocation4], 1

</llo_original>
